<compile_context>
chip_gen: v6e
topology: v6e:2x2x1
jax: 0.10.0
libtpu: 0.0.40
codegen_flags: <defaults>
</compile_context>

<pallas_src>
import jax
import jax.numpy as jnp
from jax.experimental import pallas as pl
from jax.experimental.pallas import tpu as pltpu

IN_DIM, H1, H2, H3, OUT_DIM = 339, 700, 500, 22, 1
IN_PAD = 384          # 339 zero-padded to a multiple of 128 (lane-clean K)
_TM_MAX = 1024        # batch tile (512-2048 sweep: 1024 sits on roofline plateau)


def _round_up(x, m):
    return (x + m - 1) // m * m


def critic_kernel(obs_ref, w1_ref, b1_ref, w234_ref, b234_ref, out_ref):
    # obs tile: (TM, 384) bf16 (cast + pad done fused in the wrapper).
    # Both matmuls accumulate in f32 on the MXU via preferred_element_type.
    h = jnp.dot(obs_ref[...], w1_ref[...], preferred_element_type=jnp.float32)
    h = jnp.maximum(h + b1_ref[...], 0.0)                       # relu(dense1)
    out = jnp.dot(h.astype(jnp.bfloat16), w234_ref[...],
                  preferred_element_type=jnp.float32)            # dense2..4 fused
    out_ref[...] = (out + b234_ref[...]).astype(out_ref.dtype)


def prepare_params(params):
    """Fold dense2/3/4 into one affine map, zero-pad W1's contraction dim to
    IN_PAD and cast the big weights to bf16.  Runs once, off the hot path."""
    w1, b1, w2, b2, w3, b3, w4, b4 = params
    w234 = w2 @ w3 @ w4                                # (700, 1)
    b234 = b2 @ w3 @ w4 + b3 @ w4 + b4                 # (1, 1)
    w1p = jnp.pad(w1, ((0, IN_PAD - IN_DIM), (0, 0)))  # zero rows: math no-op
    return (w1p.astype(jnp.bfloat16), b1.astype(jnp.float32),
            w234.astype(jnp.bfloat16), b234.astype(jnp.float32))


def critic_forward(obs, fused_params):
    w1, b1, w234, b234 = fused_params
    if obs.ndim == 1:                       # mirrors the PyTorch unsqueeze intent
        obs = obs[None, :]
    batch = obs.shape[0]

    # Batch tile: whole (8-padded) batch when small, else 1024-row tiles.
    if batch <= _TM_MAX:
        tm = max(8, _round_up(batch, 8))
        padded = tm
    else:
        tm = _TM_MAX
        padded = _round_up(batch, tm)

    # Mirrors obs.float(); the bf16 ingest cast fuses (under jit) with the
    # batch/K padding pass below — no standalone HBM cast pass is added.
    x = obs.astype(jnp.float32).astype(jnp.bfloat16)
    x = jnp.pad(x, ((0, padded - batch), (0, IN_PAD - IN_DIM)))

    out = pl.pallas_call(
        critic_kernel,
        out_shape=jax.ShapeDtypeStruct((padded, OUT_DIM), jnp.float32),
        grid_spec=pltpu.PrefetchScalarGridSpec(
            num_scalar_prefetch=0,
            grid=(padded // tm,),
            in_specs=[
                pl.BlockSpec((tm, IN_PAD), lambda i: (i, 0)),    # obs streams
                # Constant index_map -> DMA'd once, stays VMEM-resident.
                pl.BlockSpec((IN_PAD, H1), lambda i: (0, 0)),
                pl.BlockSpec((1, H1), lambda i: (0, 0)),
                pl.BlockSpec((H1, OUT_DIM), lambda i: (0, 0)),
                pl.BlockSpec((1, OUT_DIM), lambda i: (0, 0)),
            ],
            out_specs=pl.BlockSpec((tm, OUT_DIM), lambda i: (i, 0)),
        ),
        compiler_params=pltpu.CompilerParams(
            dimension_semantics=("parallel",),
            vmem_limit_bytes=48 * 1024 * 1024),
    )(x, w1, b1, w234, b234)
    return out[:batch]


critic_forward_jit = jax.jit(critic_forward)


def init_params(key):
    """PyTorch nn.Linear init (uniform +/-1/sqrt(fan_in)); weights stored as
    (in_features, out_features) so y = x @ W + b."""
    dims = [(IN_DIM, H1), (H1, H2), (H2, H3), (H3, OUT_DIM)]
    params = []
    for fan_in, fan_out in dims:
        kw, kb, key = jax.random.split(key, 3)
        bound = 1.0 / jnp.sqrt(jnp.float32(fan_in))
        w = jax.random.uniform(kw, (fan_in, fan_out), jnp.float32, -bound, bound)
        b = jax.random.uniform(kb, (1, fan_out), jnp.float32, -bound, bound)
        params.extend([w, b])
    return tuple(params)


def reference_forward(obs, params):
    """Pure-JAX reference with the ORIGINAL (unfused, f32) parameters."""
    w1, b1, w2, b2, w3, b3, w4, b4 = params
    h = jnp.maximum(obs @ w1 + b1, 0.0)
    h = h @ w2 + b2
    h = h @ w3 + b3
    return h @ w4 + b4


if __name__ == "__main__":
    key = jax.random.PRNGKey(0)
    k1, k2, k3, k_par = jax.random.split(key, 4)

    params = init_params(k_par)
    fused = prepare_params(params)

    # Small batch (whole-batch tile, latency path).
    obs = jax.random.normal(k1, (8, IN_DIM), dtype=jnp.float32)
    out = jax.block_until_ready(critic_forward_jit(obs, fused))
    ref = reference_forward(obs, params)
    assert out.shape == (8, OUT_DIM)
    assert jnp.allclose(out, ref, atol=2e-2, rtol=2e-2), float(
        jnp.max(jnp.abs(out - ref)))

    # Medium batch, non-multiple of 8 (exercises batch padding).
    obs2 = jax.random.normal(k2, (300, IN_DIM), dtype=jnp.float32)
    out2 = jax.block_until_ready(critic_forward_jit(obs2, fused))
    ref2 = reference_forward(obs2, params)
    assert out2.shape == (300, OUT_DIM)
    assert jnp.allclose(out2, ref2, atol=2e-2, rtol=2e-2), float(
        jnp.max(jnp.abs(out2 - ref2)))

    # Batch > TM (exercises the multi-tile grid + remainder padding path).
    obs3 = jax.random.normal(k3, (1500, IN_DIM), dtype=jnp.float32)
    out3 = jax.block_until_ready(critic_forward_jit(obs3, fused))
    ref3 = reference_forward(obs3, params)
    assert out3.shape == (1500, OUT_DIM)
    assert jnp.allclose(out3, ref3, atol=2e-2, rtol=2e-2), float(
        jnp.max(jnp.abs(out3 - ref3)))

    print("KERNEL_OK")
</pallas_src>

<mosaic_0001>
module attributes {stable_mosaic.version = 11 : i64} {
  func.func @critic_kernel(%arg0: i32, %arg1: memref<8x384xbf16, #tpu.memory_space<vmem>>, %arg2: memref<384x700xbf16, #tpu.memory_space<vmem>>, %arg3: memref<1x700xf32, #tpu.memory_space<vmem>>, %arg4: memref<700x1xbf16, #tpu.memory_space<vmem>>, %arg5: memref<1x1xf32, #tpu.memory_space<vmem>>, %arg6: memref<8x1xf32, #tpu.memory_space<vmem>>) attributes {dimension_semantics = [#tpu.dimension_semantics<parallel>], iteration_bounds = array<i64: 1>, scalar_prefetch = 0 : i64, scratch_operands = 0 : i64, tpu.core_type = #tpu.core_type<tc>, window_params = [{transform_indices = @transform_0, window_bounds = array<i64: 8, 384>}, {pipeline_mode = #tpu.pipeline_mode<synchronous>, transform_indices = @transform_1, window_bounds = array<i64: 384, 700>}, {pipeline_mode = #tpu.pipeline_mode<synchronous>, transform_indices = @transform_2, window_bounds = array<i64: 1, 700>}, {pipeline_mode = #tpu.pipeline_mode<synchronous>, transform_indices = @transform_3, window_bounds = array<i64: 700, 1>}, {pipeline_mode = #tpu.pipeline_mode<synchronous>, transform_indices = @transform_4, window_bounds = array<i64: 1, 1>}, {transform_indices = @transform_5, window_bounds = array<i64: 8, 1>}]} {
    %c0 = arith.constant 0 : index
    %c0_0 = arith.constant 0 : index
    %0 = vector.load %arg1[%c0, %c0_0] : memref<8x384xbf16, #tpu.memory_space<vmem>>, vector<8x384xbf16>
    %c0_1 = arith.constant 0 : index
    %c0_2 = arith.constant 0 : index
    %1 = vector.load %arg2[%c0_1, %c0_2] : memref<384x700xbf16, #tpu.memory_space<vmem>>, vector<384x700xbf16>
    %cst = arith.constant dense<0.000000e+00> : vector<8x700xf32>
    %2 = tpu.matmul %0, %1, %cst {dimension_numbers = #tpu.dot_dimension_numbers<[1], [0], [0], [1], [0, 0, 1, 1], [], []>} : vector<8x384xbf16>, vector<384x700xbf16>, vector<8x700xf32> -> vector<8x700xf32>
    %c0_3 = arith.constant 0 : index
    %c0_4 = arith.constant 0 : index
    %3 = vector.load %arg3[%c0_3, %c0_4] : memref<1x700xf32, #tpu.memory_space<vmem>>, vector<1x700xf32>
    %4 = vector.broadcast %3 : vector<1x700xf32> to vector<8x700xf32>
    %5 = arith.addf %2, %4 : vector<8x700xf32>
    %cst_5 = arith.constant 0.000000e+00 : f32
    %6 = vector.broadcast %cst_5 : f32 to vector<8x700xf32>
    %7 = arith.maximumf %5, %6 : vector<8x700xf32>
    %8 = arith.truncf %7 : vector<8x700xf32> to vector<8x700xbf16>
    %c0_6 = arith.constant 0 : index
    %c0_7 = arith.constant 0 : index
    %9 = vector.load %arg4[%c0_6, %c0_7] : memref<700x1xbf16, #tpu.memory_space<vmem>>, vector<700x1xbf16>
    %cst_8 = arith.constant dense<0.000000e+00> : vector<8x1xf32>
    %10 = tpu.matmul %8, %9, %cst_8 {dimension_numbers = #tpu.dot_dimension_numbers<[1], [0], [0], [1], [0, 0, 1, 1], [], []>} : vector<8x700xbf16>, vector<700x1xbf16>, vector<8x1xf32> -> vector<8x1xf32>
    %c0_9 = arith.constant 0 : index
    %c0_10 = arith.constant 0 : index
    %11 = vector.load %arg5[%c0_9, %c0_10] : memref<1x1xf32, #tpu.memory_space<vmem>>, vector<1x1xf32>
    %12 = vector.broadcast %11 : vector<1x1xf32> to vector<8x1xf32>
    %13 = arith.addf %10, %12 : vector<8x1xf32>
    %c0_11 = arith.constant 0 : index
    %c0_12 = arith.constant 0 : index
    %14 = vector.load %arg6[%c0_11, %c0_12] : memref<8x1xf32, #tpu.memory_space<vmem>>, vector<8x1xf32>
    tpu.vector_store %arg6[%c0_11, %c0_12], %13 {strides = array<i32>} : memref<8x1xf32, #tpu.memory_space<vmem>>, vector<8x1xf32>,
    return
  }
  func.func @transform_0(%arg0: i32) -> (i32, i32) {
    %c0_i32 = arith.constant 0 : i32
    %c0_i32_0 = arith.constant 0 : i32
    return %arg0, %c0_i32 : i32, i32
  }
  func.func @transform_1(%arg0: i32) -> (i32, i32) {
    %c0_i32 = arith.constant 0 : i32
    %c0_i32_0 = arith.constant 0 : i32
    %c0_i32_1 = arith.constant 0 : i32
    return %c0_i32, %c0_i32_0 : i32, i32
  }
  func.func @transform_2(%arg0: i32) -> (i32, i32) {
    %c0_i32 = arith.constant 0 : i32
    %c0_i32_0 = arith.constant 0 : i32
    %c0_i32_1 = arith.constant 0 : i32
    return %c0_i32, %c0_i32_0 : i32, i32
  }
  func.func @transform_3(%arg0: i32) -> (i32, i32) {
    %c0_i32 = arith.constant 0 : i32
    %c0_i32_0 = arith.constant 0 : i32
    %c0_i32_1 = arith.constant 0 : i32
    return %c0_i32, %c0_i32_0 : i32, i32
  }
  func.func @transform_4(%arg0: i32) -> (i32, i32) {
    %c0_i32 = arith.constant 0 : i32
    %c0_i32_0 = arith.constant 0 : i32
    %c0_i32_1 = arith.constant 0 : i32
    return %c0_i32, %c0_i32_0 : i32, i32
  }
  func.func @transform_5(%arg0: i32) -> (i32, i32) {
    %c0_i32 = arith.constant 0 : i32
    %c0_i32_0 = arith.constant 0 : i32
    return %arg0, %c0_i32 : i32, i32
  }
}

</mosaic_0001>

<llo_original>
// kernel: critic_forward.1
$region0: #{critic_forward.1}
  #allocation0 [shape = 'u32[]', space=smem, size = 0x4, offset = 0x4, fixed_abs, tag = 'smem constant byte address 0x4 - core index']
  #allocation1 [shape = 'u32[144,128]{1,0:T(1,128)}', space=vmem, size = 0x12000, scoped, tag = 'internal scratch']
  #allocation2 [shape = 'f32[1,1]{1,0:T(1,128)S(1)}', space=vmem, size = 0x200, scoped, tag = 'scoped memory for critic_forward.1']
  %s0 = inlined_call_operand.vmem [shape: bf16[8,384], index: 0, kind: input, shape index: {}]
  %s1 = inlined_call_operand.vmem [shape: bf16[384,700], index: 1, kind: input, shape index: {}]
  %s2 = inlined_call_operand.vmem [shape: f32[1,700], index: 2, kind: input, shape index: {}]
  %s3 = inlined_call_operand.vmem [shape: bf16[700,1], index: 3, kind: input, shape index: {}]
  %s4 = inlined_call_operand.<no memory space> [shape: f32[1,1], index: 4, kind: input, shape index: {}]
  %s5 = inlined_call_operand.vmem [shape: f32[8,1], index: 5, kind: output, shape index: {}]
  %s6 = sld [smem:[#allocation0]]
  $region30: #{critic_forward.1} parent=0
    _
  %s8 = ssub.s32 1, %s6
  %s9 = scalar_select 0, %s8, %s6
  %v10 = vstv %s4
  %11 = vst [vmem:[#allocation2] sm:$0x1] %v10
  // Predicated region
  $region2: #{critic_forward.1} parent=0 // pred_check
    _
  $region3: #{critic_forward.1} parent=0 // pred_check_branch
    %13 = sbr.rel (0) target = $region5
  $region4: #{critic_forward.1} parent=0 // pred_region
    _
  $region5: #{critic_forward.1} parent=0 // pred_fallthru
    _
  // Predicated region
  $region6: #{critic_forward.1} parent=0 // pred_check
    _
  $region7: #{critic_forward.1} parent=0 // pred_check_branch
    %15 = sbr.rel (0) target = $region9
  $region8: #{critic_forward.1} parent=0 // pred_region
    _
  $region9: #{critic_forward.1} parent=0 // pred_fallthru
    _
  // Predicated region
  $region10: #{critic_forward.1} parent=0 // pred_check
    _
  $region11: #{critic_forward.1} parent=0 // pred_check_branch
    %17 = sbr.rel (0) target = $region13
  $region12: #{critic_forward.1} parent=0 // pred_region
    _
  $region13: #{critic_forward.1} parent=0 // pred_fallthru
    _
  // Predicated region
  $region14: #{critic_forward.1} parent=0 // pred_check
    _
  $region15: #{critic_forward.1} parent=0 // pred_check_branch
    %19 = sbr.rel (0) target = $region17
  $region16: #{critic_forward.1} parent=0 // pred_region
    _
  $region17: #{critic_forward.1} parent=0 // pred_fallthru
    _
  // Predicated region
  $region18: #{critic_forward.1} parent=0 // pred_check
    _
  $region19: #{critic_forward.1} parent=0 // pred_check_branch
    %21 = sbr.rel (0) target = $region21
  $region20: #{critic_forward.1} parent=0 // pred_region
    _
  $region21: #{critic_forward.1} parent=0 // pred_fallthru
    _
  %v23 = vld [vmem:[%s0] sm:$0xff]
  %v24 = vld [vmem:[%s0 + $0x8] sm:$0xf]
  %v25 = vld [vmem:[%s1] sm:$0xff]
  %v26 = vld [vmem:[%s1 + $0x8] sm:$0xff]
  %v27 = vld [vmem:[%s1 + $0x10] sm:$0xff]
  %v28 = vld [vmem:[%s1 + $0x18] sm:$0xff]
  %v29 = vld [vmem:[%s1 + $0x20] sm:$0xff]
  %v30 = vld [vmem:[%s1 + $0x28] sm:$0xff]
  %v31 = vld [vmem:[%s1 + $0x30] sm:$0xff]
  %v32 = vld [vmem:[%s1 + $0x38] sm:$0xff]
  %v33 = vld [vmem:[%s1 + $0x40] sm:$0xff]
  %v34 = vld [vmem:[%s1 + $0x48] sm:$0xff]
  %v35 = vld [vmem:[%s1 + $0x50] sm:$0xff]
  %v36 = vld [vmem:[%s1 + $0x58] sm:$0xff]
  %v37 = vld [vmem:[%s1 + $0x60] sm:$0xff]
  %v38 = vld [vmem:[%s1 + $0x68] sm:$0xff]
  %v39 = vld [vmem:[%s1 + $0x70] sm:$0xff]
  %v40 = vld [vmem:[%s1 + $0x78] sm:$0xff]
  %v41 = vld [vmem:[%s1 + $0x80] sm:$0xff]
  %v42 = vld [vmem:[%s1 + $0x88] sm:$0xff]
  %v43 = vld [vmem:[%s1 + $0x90] sm:$0xff]
  %v44 = vld [vmem:[%s1 + $0x98] sm:$0xff]
  %v45 = vld [vmem:[%s1 + $0xa0] sm:$0xff]
  %v46 = vld [vmem:[%s1 + $0xa8] sm:$0xff]
  %v47 = vld [vmem:[%s1 + $0xb0] sm:$0xff]
  %v48 = vld [vmem:[%s1 + $0xb8] sm:$0xff]
  %v49 = vld [vmem:[%s1 + $0xc0] sm:$0xff]
  %v50 = vld [vmem:[%s1 + $0xc8] sm:$0xff]
  %v51 = vld [vmem:[%s1 + $0xd0] sm:$0xff]
  %v52 = vld [vmem:[%s1 + $0xd8] sm:$0xff]
  %v53 = vld [vmem:[%s1 + $0xe0] sm:$0xff]
  %v54 = vld [vmem:[%s1 + $0xe8] sm:$0xff]
  %v55 = vld [vmem:[%s1 + $0xf0] sm:$0xff]
  %v56 = vld [vmem:[%s1 + $0xf8] sm:$0xff]
  %v57 = vld [vmem:[%s1 + $0x100] sm:$0xff]
  %v58 = vld [vmem:[%s1 + $0x108] sm:$0xff]
  %v59 = vld [vmem:[%s1 + $0x110] sm:$0xff]
  %v60 = vld [vmem:[%s1 + $0x118] sm:$0xff]
  %v61 = vld [vmem:[%s1 + $0x120] sm:$0xff]
  %v62 = vld [vmem:[%s1 + $0x128] sm:$0xff]
  %v63 = vld [vmem:[%s1 + $0x130] sm:$0xff]
  %v64 = vld [vmem:[%s1 + $0x138] sm:$0xff]
  %v65 = vld [vmem:[%s1 + $0x140] sm:$0xff]
  %v66 = vld [vmem:[%s1 + $0x148] sm:$0xff]
  %v67 = vld [vmem:[%s1 + $0x150] sm:$0xff]
  %v68 = vld [vmem:[%s1 + $0x158] sm:$0xff]
  %v69 = vld [vmem:[%s1 + $0x160] sm:$0xff]
  %v70 = vld [vmem:[%s1 + $0x168] sm:$0xff]
  %v71 = vld [vmem:[%s1 + $0x170] sm:$0xff]
  %v72 = vld [vmem:[%s1 + $0x178] sm:$0xff]
  %v73 = vld [vmem:[%s1 + $0x180] sm:$0xff]
  %v74 = vld [vmem:[%s1 + $0x188] sm:$0xff]
  %v75 = vld [vmem:[%s1 + $0x190] sm:$0xff]
  %v76 = vld [vmem:[%s1 + $0x198] sm:$0xff]
  %v77 = vld [vmem:[%s1 + $0x1a0] sm:$0xff]
  %v78 = vld [vmem:[%s1 + $0x1a8] sm:$0xff]
  %v79 = vld [vmem:[%s1 + $0x1b0] sm:$0xff]
  %v80 = vld [vmem:[%s1 + $0x1b8] sm:$0xff]
  %v81 = vld [vmem:[%s1 + $0x1c0] sm:$0xff]
  %v82 = vld [vmem:[%s1 + $0x1c8] sm:$0xff]
  %v83 = vld [vmem:[%s1 + $0x1d0] sm:$0xff]
  %v84 = vld [vmem:[%s1 + $0x1d8] sm:$0xff]
  %v85 = vld [vmem:[%s1 + $0x1e0] sm:$0xff]
  %v86 = vld [vmem:[%s1 + $0x1e8] sm:$0xff]
  %v87 = vld [vmem:[%s1 + $0x1f0] sm:$0xff]
  %v88 = vld [vmem:[%s1 + $0x1f8] sm:$0xff]
  %v89 = vld [vmem:[%s1 + $0x200] sm:$0xff]
  %v90 = vld [vmem:[%s1 + $0x208] sm:$0xff]
  %v91 = vld [vmem:[%s1 + $0x210] sm:$0xff]
  %v92 = vld [vmem:[%s1 + $0x218] sm:$0xff]
  %v93 = vld [vmem:[%s1 + $0x220] sm:$0xff]
  %v94 = vld [vmem:[%s1 + $0x228] sm:$0xff]
  %v95 = vld [vmem:[%s1 + $0x230] sm:$0xff]
  %v96 = vld [vmem:[%s1 + $0x238] sm:$0xff]
  %v97 = vld [vmem:[%s1 + $0x240] sm:$0xff]
  %v98 = vld [vmem:[%s1 + $0x248] sm:$0xff]
  %v99 = vld [vmem:[%s1 + $0x250] sm:$0xff]
  %v100 = vld [vmem:[%s1 + $0x258] sm:$0xff]
  %v101 = vld [vmem:[%s1 + $0x260] sm:$0xff]
  %v102 = vld [vmem:[%s1 + $0x268] sm:$0xff]
  %v103 = vld [vmem:[%s1 + $0x270] sm:$0xff]
  %v104 = vld [vmem:[%s1 + $0x278] sm:$0xff]
  %v105 = vld [vmem:[%s1 + $0x280] sm:$0xff]
  %v106 = vld [vmem:[%s1 + $0x288] sm:$0xff]
  %v107 = vld [vmem:[%s1 + $0x290] sm:$0xff]
  %v108 = vld [vmem:[%s1 + $0x298] sm:$0xff]
  %v109 = vld [vmem:[%s1 + $0x2a0] sm:$0xff]
  %v110 = vld [vmem:[%s1 + $0x2a8] sm:$0xff]
  %v111 = vld [vmem:[%s1 + $0x2b0] sm:$0xff]
  %v112 = vld [vmem:[%s1 + $0x2b8] sm:$0xff]
  %v113 = vld [vmem:[%s1 + $0x2c0] sm:$0xff]
  %v114 = vld [vmem:[%s1 + $0x2c8] sm:$0xff]
  %v115 = vld [vmem:[%s1 + $0x2d0] sm:$0xff]
  %v116 = vld [vmem:[%s1 + $0x2d8] sm:$0xff]
  %v117 = vld [vmem:[%s1 + $0x2e0] sm:$0xff]
  %v118 = vld [vmem:[%s1 + $0x2e8] sm:$0xff]
  %v119 = vld [vmem:[%s1 + $0x2f0] sm:$0xff]
  %v120 = vld [vmem:[%s1 + $0x2f8] sm:$0xff]
  %v121 = vld [vmem:[%s1 + $0x300] sm:$0xff]
  %v122 = vld [vmem:[%s1 + $0x308] sm:$0xff]
  %v123 = vld [vmem:[%s1 + $0x310] sm:$0xff]
  %v124 = vld [vmem:[%s1 + $0x318] sm:$0xff]
  %v125 = vld [vmem:[%s1 + $0x320] sm:$0xff]
  %v126 = vld [vmem:[%s1 + $0x328] sm:$0xff]
  %v127 = vld [vmem:[%s1 + $0x330] sm:$0xff]
  %v128 = vld [vmem:[%s1 + $0x338] sm:$0xff]
  %v129 = vld [vmem:[%s1 + $0x340] sm:$0xff]
  %v130 = vld [vmem:[%s1 + $0x348] sm:$0xff]
  %v131 = vld [vmem:[%s1 + $0x350] sm:$0xff]
  %v132 = vld [vmem:[%s1 + $0x358] sm:$0xff]
  %v133 = vld [vmem:[%s1 + $0x360] sm:$0xff]
  %v134 = vld [vmem:[%s1 + $0x368] sm:$0xff]
  %v135 = vld [vmem:[%s1 + $0x370] sm:$0xff]
  %v136 = vld [vmem:[%s1 + $0x378] sm:$0xff]
  %v137 = vld [vmem:[%s1 + $0x380] sm:$0xff]
  %v138 = vld [vmem:[%s1 + $0x388] sm:$0xff]
  %v139 = vld [vmem:[%s1 + $0x390] sm:$0xff]
  %v140 = vld [vmem:[%s1 + $0x398] sm:$0xff]
  %v141 = vld [vmem:[%s1 + $0x3a0] sm:$0xff]
  %v142 = vld [vmem:[%s1 + $0x3a8] sm:$0xff]
  %v143 = vld [vmem:[%s1 + $0x3b0] sm:$0xff]
  %v144 = vld [vmem:[%s1 + $0x3b8] sm:$0xff]
  %v145 = vld [vmem:[%s1 + $0x3c0] sm:$0xff]
  %v146 = vld [vmem:[%s1 + $0x3c8] sm:$0xff]
  %v147 = vld [vmem:[%s1 + $0x3d0] sm:$0xff]
  %v148 = vld [vmem:[%s1 + $0x3d8] sm:$0xff]
  %v149 = vld [vmem:[%s1 + $0x3e0] sm:$0xff]
  %v150 = vld [vmem:[%s1 + $0x3e8] sm:$0xff]
  %v151 = vld [vmem:[%s1 + $0x3f0] sm:$0xff]
  %v152 = vld [vmem:[%s1 + $0x3f8] sm:$0xff]
  %v153 = vld [vmem:[%s1 + $0x400] sm:$0xff]
  %v154 = vld [vmem:[%s1 + $0x408] sm:$0xff]
  %v155 = vld [vmem:[%s1 + $0x410] sm:$0xff]
  %v156 = vld [vmem:[%s1 + $0x418] sm:$0xff]
  %v157 = vld [vmem:[%s1 + $0x420] sm:$0xff]
  %v158 = vld [vmem:[%s1 + $0x428] sm:$0xff]
  %v159 = vld [vmem:[%s1 + $0x430] sm:$0xff]
  %v160 = vld [vmem:[%s1 + $0x438] sm:$0xff]
  %v161 = vld [vmem:[%s1 + $0x440] sm:$0xff]
  %v162 = vld [vmem:[%s1 + $0x448] sm:$0xff]
  %v163 = vld [vmem:[%s1 + $0x450] sm:$0xff]
  %v164 = vld [vmem:[%s1 + $0x458] sm:$0xff]
  %v165 = vld [vmem:[%s1 + $0x460] sm:$0xff]
  %v166 = vld [vmem:[%s1 + $0x468] sm:$0xff]
  %v167 = vld [vmem:[%s1 + $0x470] sm:$0xff]
  %v168 = vld [vmem:[%s1 + $0x478] sm:$0xff]
  %v169 = vld [vmem:[%s2] sm:$0x3f]
  %v171 = vlaneseq
  %v172 = vshrl.u32 %v171, 7
  %v173 = vsub.s32 0, %v172
  %v174 = vrot.slane %v169, %v173
  %v175 = vlaneseq
  %v176 = vshrl.u32 %v175, 7
  %v177 = vsub.s32 1, %v176
  %v178 = vrot.slane %v169, %v177
  %v179 = vlaneseq
  %v180 = vshrl.u32 %v179, 7
  %v181 = vsub.s32 2, %v180
  %v182 = vrot.slane %v169, %v181
  %v183 = vlaneseq
  %v184 = vshrl.u32 %v183, 7
  %v185 = vsub.s32 3, %v184
  %v186 = vrot.slane %v169, %v185
  %v187 = vlaneseq
  %v188 = vshrl.u32 %v187, 7
  %v189 = vsub.s32 4, %v188
  %v190 = vrot.slane %v169, %v189
  %v191 = vlaneseq
  %v192 = vshrl.u32 %v191, 7
  %v193 = vsub.s32 5, %v192
  %v194 = vrot.slane %v169, %v193
  %v203 = vunpack.c.l.b16 %v23
  %v204 = vunpack.c.h.b16 %v23
  %v205 = vunpack.c.l.b16 %v24
  %v206 = vpack.c.b16 %v203, %v203
  %v207 = vpack.c.b16 %v204, %v204
  %v208 = vpack.c.b16 %v205, %v205
  %v356 = vunpack.c.l.b16 %v25
  %v357 = vunpack.c.h.b16 %v25
  %v358 = vunpack.c.l.b16 %v26
  %v359 = vunpack.c.h.b16 %v26
  %v360 = vunpack.c.l.b16 %v27
  %v361 = vunpack.c.h.b16 %v27
  %v362 = vunpack.c.l.b16 %v28
  %v363 = vunpack.c.h.b16 %v28
  %v364 = vunpack.c.l.b16 %v29
  %v365 = vunpack.c.h.b16 %v29
  %v366 = vunpack.c.l.b16 %v30
  %v367 = vunpack.c.h.b16 %v30
  %v368 = vunpack.c.l.b16 %v31
  %v369 = vunpack.c.h.b16 %v31
  %v370 = vunpack.c.l.b16 %v32
  %v371 = vunpack.c.h.b16 %v32
  %v372 = vunpack.c.l.b16 %v33
  %v373 = vunpack.c.h.b16 %v33
  %v374 = vunpack.c.l.b16 %v34
  %v375 = vunpack.c.h.b16 %v34
  %v376 = vunpack.c.l.b16 %v35
  %v377 = vunpack.c.h.b16 %v35
  %v378 = vunpack.c.l.b16 %v36
  %v379 = vunpack.c.h.b16 %v36
  %v380 = vunpack.c.l.b16 %v37
  %v381 = vunpack.c.h.b16 %v37
  %v382 = vunpack.c.l.b16 %v38
  %v383 = vunpack.c.h.b16 %v38
  %v384 = vunpack.c.l.b16 %v39
  %v385 = vunpack.c.h.b16 %v39
  %v386 = vunpack.c.l.b16 %v40
  %v387 = vunpack.c.h.b16 %v40
  %v388 = vunpack.c.l.b16 %v41
  %v389 = vunpack.c.h.b16 %v41
  %v390 = vunpack.c.l.b16 %v42
  %v391 = vunpack.c.h.b16 %v42
  %v392 = vunpack.c.l.b16 %v43
  %v393 = vunpack.c.h.b16 %v43
  %v394 = vunpack.c.l.b16 %v44
  %v395 = vunpack.c.h.b16 %v44
  %v396 = vunpack.c.l.b16 %v45
  %v397 = vunpack.c.h.b16 %v45
  %v398 = vunpack.c.l.b16 %v46
  %v399 = vunpack.c.h.b16 %v46
  %v400 = vunpack.c.l.b16 %v47
  %v401 = vunpack.c.h.b16 %v47
  %v402 = vunpack.c.l.b16 %v48
  %v403 = vunpack.c.h.b16 %v48
  %v404 = vunpack.c.l.b16 %v49
  %v405 = vunpack.c.h.b16 %v49
  %v406 = vunpack.c.l.b16 %v50
  %v407 = vunpack.c.h.b16 %v50
  %v408 = vunpack.c.l.b16 %v51
  %v409 = vunpack.c.h.b16 %v51
  %v410 = vunpack.c.l.b16 %v52
  %v411 = vunpack.c.h.b16 %v52
  %v412 = vunpack.c.l.b16 %v53
  %v413 = vunpack.c.h.b16 %v53
  %v414 = vunpack.c.l.b16 %v54
  %v415 = vunpack.c.h.b16 %v54
  %v416 = vunpack.c.l.b16 %v55
  %v417 = vunpack.c.h.b16 %v55
  %v418 = vunpack.c.l.b16 %v56
  %v419 = vunpack.c.h.b16 %v56
  %v420 = vunpack.c.l.b16 %v57
  %v421 = vunpack.c.h.b16 %v57
  %v422 = vunpack.c.l.b16 %v58
  %v423 = vunpack.c.h.b16 %v58
  %v424 = vunpack.c.l.b16 %v59
  %v425 = vunpack.c.h.b16 %v59
  %v426 = vunpack.c.l.b16 %v60
  %v427 = vunpack.c.h.b16 %v60
  %v428 = vunpack.c.l.b16 %v61
  %v429 = vunpack.c.h.b16 %v61
  %v430 = vunpack.c.l.b16 %v62
  %v431 = vunpack.c.h.b16 %v62
  %v432 = vunpack.c.l.b16 %v63
  %v433 = vunpack.c.h.b16 %v63
  %v434 = vunpack.c.l.b16 %v64
  %v435 = vunpack.c.h.b16 %v64
  %v436 = vunpack.c.l.b16 %v65
  %v437 = vunpack.c.h.b16 %v65
  %v438 = vunpack.c.l.b16 %v66
  %v439 = vunpack.c.h.b16 %v66
  %v440 = vunpack.c.l.b16 %v67
  %v441 = vunpack.c.h.b16 %v67
  %v442 = vunpack.c.l.b16 %v68
  %v443 = vunpack.c.h.b16 %v68
  %v444 = vunpack.c.l.b16 %v69
  %v445 = vunpack.c.h.b16 %v69
  %v446 = vunpack.c.l.b16 %v70
  %v447 = vunpack.c.h.b16 %v70
  %v448 = vunpack.c.l.b16 %v71
  %v449 = vunpack.c.h.b16 %v71
  %v450 = vunpack.c.l.b16 %v72
  %v451 = vunpack.c.h.b16 %v72
  %v452 = vunpack.c.l.b16 %v73
  %v453 = vunpack.c.h.b16 %v73
  %v454 = vunpack.c.l.b16 %v74
  %v455 = vunpack.c.h.b16 %v74
  %v456 = vunpack.c.l.b16 %v75
  %v457 = vunpack.c.h.b16 %v75
  %v458 = vunpack.c.l.b16 %v76
  %v459 = vunpack.c.h.b16 %v76
  %v460 = vunpack.c.l.b16 %v77
  %v461 = vunpack.c.h.b16 %v77
  %v462 = vunpack.c.l.b16 %v78
  %v463 = vunpack.c.h.b16 %v78
  %v464 = vunpack.c.l.b16 %v79
  %v465 = vunpack.c.h.b16 %v79
  %v466 = vunpack.c.l.b16 %v80
  %v467 = vunpack.c.h.b16 %v80
  %v468 = vunpack.c.l.b16 %v81
  %v469 = vunpack.c.h.b16 %v81
  %v470 = vunpack.c.l.b16 %v82
  %v471 = vunpack.c.h.b16 %v82
  %v472 = vunpack.c.l.b16 %v83
  %v473 = vunpack.c.h.b16 %v83
  %v474 = vunpack.c.l.b16 %v84
  %v475 = vunpack.c.h.b16 %v84
  %v476 = vunpack.c.l.b16 %v85
  %v477 = vunpack.c.h.b16 %v85
  %v478 = vunpack.c.l.b16 %v86
  %v479 = vunpack.c.h.b16 %v86
  %v480 = vunpack.c.l.b16 %v87
  %v481 = vunpack.c.h.b16 %v87
  %v482 = vunpack.c.l.b16 %v88
  %v483 = vunpack.c.h.b16 %v88
  %v484 = vunpack.c.l.b16 %v89
  %v485 = vunpack.c.h.b16 %v89
  %v486 = vunpack.c.l.b16 %v90
  %v487 = vunpack.c.h.b16 %v90
  %v488 = vunpack.c.l.b16 %v91
  %v489 = vunpack.c.h.b16 %v91
  %v490 = vunpack.c.l.b16 %v92
  %v491 = vunpack.c.h.b16 %v92
  %v492 = vunpack.c.l.b16 %v93
  %v493 = vunpack.c.h.b16 %v93
  %v494 = vunpack.c.l.b16 %v94
  %v495 = vunpack.c.h.b16 %v94
  %v496 = vunpack.c.l.b16 %v95
  %v497 = vunpack.c.h.b16 %v95
  %v498 = vunpack.c.l.b16 %v96
  %v499 = vunpack.c.h.b16 %v96
  %v500 = vunpack.c.l.b16 %v97
  %v501 = vunpack.c.h.b16 %v97
  %v502 = vunpack.c.l.b16 %v98
  %v503 = vunpack.c.h.b16 %v98
  %v504 = vunpack.c.l.b16 %v99
  %v505 = vunpack.c.h.b16 %v99
  %v506 = vunpack.c.l.b16 %v100
  %v507 = vunpack.c.h.b16 %v100
  %v508 = vunpack.c.l.b16 %v101
  %v509 = vunpack.c.h.b16 %v101
  %v510 = vunpack.c.l.b16 %v102
  %v511 = vunpack.c.h.b16 %v102
  %v512 = vunpack.c.l.b16 %v103
  %v513 = vunpack.c.h.b16 %v103
  %v514 = vunpack.c.l.b16 %v104
  %v515 = vunpack.c.h.b16 %v104
  %v516 = vunpack.c.l.b16 %v105
  %v517 = vunpack.c.h.b16 %v105
  %v518 = vunpack.c.l.b16 %v106
  %v519 = vunpack.c.h.b16 %v106
  %v520 = vunpack.c.l.b16 %v107
  %v521 = vunpack.c.h.b16 %v107
  %v522 = vunpack.c.l.b16 %v108
  %v523 = vunpack.c.h.b16 %v108
  %v524 = vunpack.c.l.b16 %v109
  %v525 = vunpack.c.h.b16 %v109
  %v526 = vunpack.c.l.b16 %v110
  %v527 = vunpack.c.h.b16 %v110
  %v528 = vunpack.c.l.b16 %v111
  %v529 = vunpack.c.h.b16 %v111
  %v530 = vunpack.c.l.b16 %v112
  %v531 = vunpack.c.h.b16 %v112
  %v532 = vunpack.c.l.b16 %v113
  %v533 = vunpack.c.h.b16 %v113
  %v534 = vunpack.c.l.b16 %v114
  %v535 = vunpack.c.h.b16 %v114
  %v536 = vunpack.c.l.b16 %v115
  %v537 = vunpack.c.h.b16 %v115
  %v538 = vunpack.c.l.b16 %v116
  %v539 = vunpack.c.h.b16 %v116
  %v540 = vunpack.c.l.b16 %v117
  %v541 = vunpack.c.h.b16 %v117
  %v542 = vunpack.c.l.b16 %v118
  %v543 = vunpack.c.h.b16 %v118
  %v544 = vunpack.c.l.b16 %v119
  %v545 = vunpack.c.h.b16 %v119
  %v546 = vunpack.c.l.b16 %v120
  %v547 = vunpack.c.h.b16 %v120
  %v548 = vunpack.c.l.b16 %v121
  %v549 = vunpack.c.h.b16 %v121
  %v550 = vunpack.c.l.b16 %v122
  %v551 = vunpack.c.h.b16 %v122
  %v552 = vunpack.c.l.b16 %v123
  %v553 = vunpack.c.h.b16 %v123
  %v554 = vunpack.c.l.b16 %v124
  %v555 = vunpack.c.h.b16 %v124
  %v556 = vunpack.c.l.b16 %v125
  %v557 = vunpack.c.h.b16 %v125
  %v558 = vunpack.c.l.b16 %v126
  %v559 = vunpack.c.h.b16 %v126
  %v560 = vunpack.c.l.b16 %v127
  %v561 = vunpack.c.h.b16 %v127
  %v562 = vunpack.c.l.b16 %v128
  %v563 = vunpack.c.h.b16 %v128
  %v564 = vunpack.c.l.b16 %v129
  %v565 = vunpack.c.h.b16 %v129
  %v566 = vunpack.c.l.b16 %v130
  %v567 = vunpack.c.h.b16 %v130
  %v568 = vunpack.c.l.b16 %v131
  %v569 = vunpack.c.h.b16 %v131
  %v570 = vunpack.c.l.b16 %v132
  %v571 = vunpack.c.h.b16 %v132
  %v572 = vunpack.c.l.b16 %v133
  %v573 = vunpack.c.h.b16 %v133
  %v574 = vunpack.c.l.b16 %v134
  %v575 = vunpack.c.h.b16 %v134
  %v576 = vunpack.c.l.b16 %v135
  %v577 = vunpack.c.h.b16 %v135
  %v578 = vunpack.c.l.b16 %v136
  %v579 = vunpack.c.h.b16 %v136
  %v580 = vunpack.c.l.b16 %v137
  %v581 = vunpack.c.h.b16 %v137
  %v582 = vunpack.c.l.b16 %v138
  %v583 = vunpack.c.h.b16 %v138
  %v584 = vunpack.c.l.b16 %v139
  %v585 = vunpack.c.h.b16 %v139
  %v586 = vunpack.c.l.b16 %v140
  %v587 = vunpack.c.h.b16 %v140
  %v588 = vunpack.c.l.b16 %v141
  %v589 = vunpack.c.h.b16 %v141
  %v590 = vunpack.c.l.b16 %v142
  %v591 = vunpack.c.h.b16 %v142
  %v592 = vunpack.c.l.b16 %v143
  %v593 = vunpack.c.h.b16 %v143
  %v594 = vunpack.c.l.b16 %v144
  %v595 = vunpack.c.h.b16 %v144
  %v596 = vunpack.c.l.b16 %v145
  %v597 = vunpack.c.h.b16 %v145
  %v598 = vunpack.c.l.b16 %v146
  %v599 = vunpack.c.h.b16 %v146
  %v600 = vunpack.c.l.b16 %v147
  %v601 = vunpack.c.h.b16 %v147
  %v602 = vunpack.c.l.b16 %v148
  %v603 = vunpack.c.h.b16 %v148
  %v604 = vunpack.c.l.b16 %v149
  %v605 = vunpack.c.h.b16 %v149
  %v606 = vunpack.c.l.b16 %v150
  %v607 = vunpack.c.h.b16 %v150
  %v608 = vunpack.c.l.b16 %v151
  %v609 = vunpack.c.h.b16 %v151
  %v610 = vunpack.c.l.b16 %v152
  %v611 = vunpack.c.h.b16 %v152
  %v612 = vunpack.c.l.b16 %v153
  %v613 = vunpack.c.h.b16 %v153
  %v614 = vunpack.c.l.b16 %v154
  %v615 = vunpack.c.h.b16 %v154
  %v616 = vunpack.c.l.b16 %v155
  %v617 = vunpack.c.h.b16 %v155
  %v618 = vunpack.c.l.b16 %v156
  %v619 = vunpack.c.h.b16 %v156
  %v620 = vunpack.c.l.b16 %v157
  %v621 = vunpack.c.h.b16 %v157
  %v622 = vunpack.c.l.b16 %v158
  %v623 = vunpack.c.h.b16 %v158
  %v624 = vunpack.c.l.b16 %v159
  %v625 = vunpack.c.h.b16 %v159
  %v626 = vunpack.c.l.b16 %v160
  %v627 = vunpack.c.h.b16 %v160
  %v628 = vunpack.c.l.b16 %v161
  %v629 = vunpack.c.h.b16 %v161
  %v630 = vunpack.c.l.b16 %v162
  %v631 = vunpack.c.h.b16 %v162
  %v632 = vunpack.c.l.b16 %v163
  %v633 = vunpack.c.h.b16 %v163
  %v634 = vunpack.c.l.b16 %v164
  %v635 = vunpack.c.h.b16 %v164
  %v636 = vunpack.c.l.b16 %v165
  %v637 = vunpack.c.h.b16 %v165
  %v638 = vunpack.c.l.b16 %v166
  %v639 = vunpack.c.h.b16 %v166
  %v640 = vunpack.c.l.b16 %v167
  %v641 = vunpack.c.h.b16 %v167
  %v642 = vunpack.c.l.b16 %v168
  %v643 = vunpack.c.h.b16 %v168
  %v644 = vpack.c.b16 %v362, %v356
  %v645 = vpack.c.b16 %v363, %v357
  %v646 = vpack.c.b16 %v364, %v358
  %v647 = vpack.c.b16 %v365, %v359
  %v648 = vpack.c.b16 %v366, %v360
  %v649 = vpack.c.b16 %v367, %v361
  %v650 = vpack.c.b16 %v374, %v368
  %v651 = vpack.c.b16 %v375, %v369
  %v652 = vpack.c.b16 %v376, %v370
  %v653 = vpack.c.b16 %v377, %v371
  %v654 = vpack.c.b16 %v378, %v372
  %v655 = vpack.c.b16 %v379, %v373
  %v656 = vpack.c.b16 %v386, %v380
  %v657 = vpack.c.b16 %v387, %v381
  %v658 = vpack.c.b16 %v388, %v382
  %v659 = vpack.c.b16 %v389, %v383
  %v660 = vpack.c.b16 %v390, %v384
  %v661 = vpack.c.b16 %v391, %v385
  %v662 = vpack.c.b16 %v398, %v392
  %v663 = vpack.c.b16 %v399, %v393
  %v664 = vpack.c.b16 %v400, %v394
  %v665 = vpack.c.b16 %v401, %v395
  %v666 = vpack.c.b16 %v402, %v396
  %v667 = vpack.c.b16 %v403, %v397
  %v668 = vpack.c.b16 %v410, %v404
  %v669 = vpack.c.b16 %v411, %v405
  %v670 = vpack.c.b16 %v412, %v406
  %v671 = vpack.c.b16 %v413, %v407
  %v672 = vpack.c.b16 %v414, %v408
  %v673 = vpack.c.b16 %v415, %v409
  %v674 = vpack.c.b16 %v422, %v416
  %v675 = vpack.c.b16 %v423, %v417
  %v676 = vpack.c.b16 %v424, %v418
  %v677 = vpack.c.b16 %v425, %v419
  %v678 = vpack.c.b16 %v426, %v420
  %v679 = vpack.c.b16 %v427, %v421
  %v680 = vpack.c.b16 %v434, %v428
  %v681 = vpack.c.b16 %v435, %v429
  %v682 = vpack.c.b16 %v436, %v430
  %v683 = vpack.c.b16 %v437, %v431
  %v684 = vpack.c.b16 %v438, %v432
  %v685 = vpack.c.b16 %v439, %v433
  %v686 = vpack.c.b16 %v446, %v440
  %v687 = vpack.c.b16 %v447, %v441
  %v688 = vpack.c.b16 %v448, %v442
  %v689 = vpack.c.b16 %v449, %v443
  %v690 = vpack.c.b16 %v450, %v444
  %v691 = vpack.c.b16 %v451, %v445
  %v692 = vpack.c.b16 %v458, %v452
  %v693 = vpack.c.b16 %v459, %v453
  %v694 = vpack.c.b16 %v460, %v454
  %v695 = vpack.c.b16 %v461, %v455
  %v696 = vpack.c.b16 %v462, %v456
  %v697 = vpack.c.b16 %v463, %v457
  %v698 = vpack.c.b16 %v470, %v464
  %v699 = vpack.c.b16 %v471, %v465
  %v700 = vpack.c.b16 %v472, %v466
  %v701 = vpack.c.b16 %v473, %v467
  %v702 = vpack.c.b16 %v474, %v468
  %v703 = vpack.c.b16 %v475, %v469
  %v704 = vpack.c.b16 %v482, %v476
  %v705 = vpack.c.b16 %v483, %v477
  %v706 = vpack.c.b16 %v484, %v478
  %v707 = vpack.c.b16 %v485, %v479
  %v708 = vpack.c.b16 %v486, %v480
  %v709 = vpack.c.b16 %v487, %v481
  %v710 = vpack.c.b16 %v494, %v488
  %v711 = vpack.c.b16 %v495, %v489
  %v712 = vpack.c.b16 %v496, %v490
  %v713 = vpack.c.b16 %v497, %v491
  %v714 = vpack.c.b16 %v498, %v492
  %v715 = vpack.c.b16 %v499, %v493
  %v716 = vpack.c.b16 %v506, %v500
  %v717 = vpack.c.b16 %v507, %v501
  %v718 = vpack.c.b16 %v508, %v502
  %v719 = vpack.c.b16 %v509, %v503
  %v720 = vpack.c.b16 %v510, %v504
  %v721 = vpack.c.b16 %v511, %v505
  %v722 = vpack.c.b16 %v518, %v512
  %v723 = vpack.c.b16 %v519, %v513
  %v724 = vpack.c.b16 %v520, %v514
  %v725 = vpack.c.b16 %v521, %v515
  %v726 = vpack.c.b16 %v522, %v516
  %v727 = vpack.c.b16 %v523, %v517
  %v728 = vpack.c.b16 %v530, %v524
  %v729 = vpack.c.b16 %v531, %v525
  %v730 = vpack.c.b16 %v532, %v526
  %v731 = vpack.c.b16 %v533, %v527
  %v732 = vpack.c.b16 %v534, %v528
  %v733 = vpack.c.b16 %v535, %v529
  %v734 = vpack.c.b16 %v542, %v536
  %v735 = vpack.c.b16 %v543, %v537
  %v736 = vpack.c.b16 %v544, %v538
  %v737 = vpack.c.b16 %v545, %v539
  %v738 = vpack.c.b16 %v546, %v540
  %v739 = vpack.c.b16 %v547, %v541
  %v740 = vpack.c.b16 %v554, %v548
  %v741 = vpack.c.b16 %v555, %v549
  %v742 = vpack.c.b16 %v556, %v550
  %v743 = vpack.c.b16 %v557, %v551
  %v744 = vpack.c.b16 %v558, %v552
  %v745 = vpack.c.b16 %v559, %v553
  %v746 = vpack.c.b16 %v566, %v560
  %v747 = vpack.c.b16 %v567, %v561
  %v748 = vpack.c.b16 %v568, %v562
  %v749 = vpack.c.b16 %v569, %v563
  %v750 = vpack.c.b16 %v570, %v564
  %v751 = vpack.c.b16 %v571, %v565
  %v752 = vpack.c.b16 %v578, %v572
  %v753 = vpack.c.b16 %v579, %v573
  %v754 = vpack.c.b16 %v580, %v574
  %v755 = vpack.c.b16 %v581, %v575
  %v756 = vpack.c.b16 %v582, %v576
  %v757 = vpack.c.b16 %v583, %v577
  %v758 = vpack.c.b16 %v590, %v584
  %v759 = vpack.c.b16 %v591, %v585
  %v760 = vpack.c.b16 %v592, %v586
  %v761 = vpack.c.b16 %v593, %v587
  %v762 = vpack.c.b16 %v594, %v588
  %v763 = vpack.c.b16 %v595, %v589
  %v764 = vpack.c.b16 %v602, %v596
  %v765 = vpack.c.b16 %v603, %v597
  %v766 = vpack.c.b16 %v604, %v598
  %v767 = vpack.c.b16 %v605, %v599
  %v768 = vpack.c.b16 %v606, %v600
  %v769 = vpack.c.b16 %v607, %v601
  %v770 = vpack.c.b16 %v614, %v608
  %v771 = vpack.c.b16 %v615, %v609
  %v772 = vpack.c.b16 %v616, %v610
  %v773 = vpack.c.b16 %v617, %v611
  %v774 = vpack.c.b16 %v618, %v612
  %v775 = vpack.c.b16 %v619, %v613
  %v776 = vpack.c.b16 %v626, %v620
  %v777 = vpack.c.b16 %v627, %v621
  %v778 = vpack.c.b16 %v628, %v622
  %v779 = vpack.c.b16 %v629, %v623
  %v780 = vpack.c.b16 %v630, %v624
  %v781 = vpack.c.b16 %v631, %v625
  %v782 = vpack.c.b16 %v638, %v632
  %v783 = vpack.c.b16 %v639, %v633
  %v784 = vpack.c.b16 %v640, %v634
  %v785 = vpack.c.b16 %v641, %v635
  %v786 = vpack.c.b16 %v642, %v636
  %v787 = vpack.c.b16 %v643, %v637
  %932 = vmatprep.subr.bf16.mxu0 %v687
  %933 = vmatpush1.bf16.msra.mxu0 %v686
  %934 = vmatprep.subr.bf16.mxu0 %v681
  %935 = vmatpush1.bf16.msra.mxu0 %v680
  %936 = vmatprep.subr.bf16.mxu0 %v675
  %937 = vmatpush1.bf16.msra.mxu0 %v674
  %938 = vmatprep.subr.bf16.mxu0 %v669
  %939 = vmatpush1.bf16.msra.mxu0 %v668
  %940 = vmatprep.subr.bf16.mxu0 %v663
  %941 = vmatpush1.bf16.msra.mxu0 %v662
  %942 = vmatprep.subr.bf16.mxu0 %v657
  %943 = vmatpush1.bf16.msra.mxu0 %v656
  %944 = vmatprep.subr.bf16.mxu0 %v651
  %945 = vmatpush1.bf16.msra.mxu0 %v650
  %946 = vmatprep.subr.bf16.mxu0 %v645
  %947 = vmatpush1.bf16.msra.mxu0 %v644
  %948 = vmatprep.subr.bf16.mxu0 %v735
  %949 = vmatpush2.bf16.msra.mxu0 %v734
  %950 = vmatprep.subr.bf16.mxu0 %v729
  %951 = vmatpush2.bf16.msra.mxu0 %v728
  %952 = vmatprep.subr.bf16.mxu0 %v723
  %953 = vmatpush2.bf16.msra.mxu0 %v722
  %954 = vmatprep.subr.bf16.mxu0 %v717
  %955 = vmatpush2.bf16.msra.mxu0 %v716
  %956 = vmatprep.subr.bf16.mxu0 %v711
  %957 = vmatpush2.bf16.msra.mxu0 %v710
  %958 = vmatprep.subr.bf16.mxu0 %v705
  %959 = vmatpush2.bf16.msra.mxu0 %v704
  %960 = vmatprep.subr.bf16.mxu0 %v699
  %961 = vmatpush2.bf16.msra.mxu0 %v698
  %962 = vmatprep.subr.bf16.mxu0 %v693
  %963 = vmatpush2.bf16.msra.mxu0 %v692
  %964 = vmatprep.mubr.bf16.mxu0 %v207
  %965 = vmatmul.mubr.bf16.gmra.mxu0 %v206
  %v966 = vpop.f32.mrf.mxu0
  %v967 = vadd.f32 %v174, %v966
  %v968 = vpop.f32.mrf.mxu0
  %v969 = vadd.f32 %v178, %v968
  %v970 = vpop.f32.mrf.mxu0
  %v971 = vpop.f32.mrf.mxu0
  %972 = vdwg.mxu0
  %973 = vmatprep.subr.bf16.mxu0 %v783
  %974 = vmatpush1.bf16.msra.mxu0 %v782
  %975 = vmatprep.subr.bf16.mxu0 %v777
  %976 = vmatpush1.bf16.msra.mxu0 %v776
  %977 = vmatprep.subr.bf16.mxu0 %v771
  %978 = vmatpush1.bf16.msra.mxu0 %v770
  %979 = vmatprep.subr.bf16.mxu0 %v765
  %980 = vmatpush1.bf16.msra.mxu0 %v764
  %981 = vmatprep.subr.bf16.mxu0 %v759
  %982 = vmatpush1.bf16.msra.mxu0 %v758
  %983 = vmatprep.subr.bf16.mxu0 %v753
  %984 = vmatpush1.bf16.msra.mxu0 %v752
  %985 = vmatprep.subr.bf16.mxu0 %v747
  %986 = vmatpush1.bf16.msra.mxu0 %v746
  %987 = vmatprep.subr.bf16.mxu0 %v741
  %988 = vmatpush1.bf16.msra.mxu0 %v740
  %989 = vmatprep.subr.bf16.mxu0 0
  %990 = vmatpush2.bf16.msra.mxu0 0
  %991 = vmatprep.subr.bf16.mxu0 0
  %992 = vmatpush2.bf16.msra.mxu0 0
  %993 = vmatprep.subr.bf16.mxu0 0
  %994 = vmatpush2.bf16.msra.mxu0 0
  %995 = vmatprep.subr.bf16.mxu0 0
  %996 = vmatpush2.bf16.msra.mxu0 0
  %997 = vmatprep.subr.bf16.mxu0 0
  %998 = vmatpush2.bf16.msra.mxu0 0
  %999 = vmatprep.subr.bf16.mxu0 0
  %1000 = vmatpush2.bf16.msra.mxu0 0
  %1001 = vmatprep.subr.bf16.mxu0 0
  %1002 = vmatpush2.bf16.msra.mxu0 0
  %1003 = vmatprep.subr.bf16.mxu0 0
  %1004 = vmatpush2.bf16.msra.mxu0 0
  %1005 = vmatprep.mubr.bf16.mxu0 0
  %1006 = vmatmul.mubr.bf16.gmra.mxu0 %v208
  %v1007 = vpop.f32.mrf.mxu0
  %v1008 = vadd.f32 %v967, %v1007
  %v1009 = vpop.f32.mrf.mxu0
  %v1010 = vadd.f32 %v969, %v1009
  %v1011 = vpop.f32.mrf.mxu0
  %v1012 = vpop.f32.mrf.mxu0
  %1013 = vdwg.mxu0
  %1014 = vmatprep.subr.bf16.mxu0 %v689
  %1015 = vmatpush1.bf16.msra.mxu0 %v688
  %1016 = vmatprep.subr.bf16.mxu0 %v683
  %1017 = vmatpush1.bf16.msra.mxu0 %v682
  %1018 = vmatprep.subr.bf16.mxu0 %v677
  %1019 = vmatpush1.bf16.msra.mxu0 %v676
  %1020 = vmatprep.subr.bf16.mxu0 %v671
  %1021 = vmatpush1.bf16.msra.mxu0 %v670
  %1022 = vmatprep.subr.bf16.mxu0 %v665
  %1023 = vmatpush1.bf16.msra.mxu0 %v664
  %1024 = vmatprep.subr.bf16.mxu0 %v659
  %1025 = vmatpush1.bf16.msra.mxu0 %v658
  %1026 = vmatprep.subr.bf16.mxu0 %v653
  %1027 = vmatpush1.bf16.msra.mxu0 %v652
  %1028 = vmatprep.subr.bf16.mxu0 %v647
  %1029 = vmatpush1.bf16.msra.mxu0 %v646
  %1030 = vmatprep.subr.bf16.mxu0 %v737
  %1031 = vmatpush2.bf16.msra.mxu0 %v736
  %1032 = vmatprep.subr.bf16.mxu0 %v731
  %1033 = vmatpush2.bf16.msra.mxu0 %v730
  %1034 = vmatprep.subr.bf16.mxu0 %v725
  %1035 = vmatpush2.bf16.msra.mxu0 %v724
  %1036 = vmatprep.subr.bf16.mxu0 %v719
  %1037 = vmatpush2.bf16.msra.mxu0 %v718
  %1038 = vmatprep.subr.bf16.mxu0 %v713
  %1039 = vmatpush2.bf16.msra.mxu0 %v712
  %1040 = vmatprep.subr.bf16.mxu0 %v707
  %1041 = vmatpush2.bf16.msra.mxu0 %v706
  %1042 = vmatprep.subr.bf16.mxu0 %v701
  %1043 = vmatpush2.bf16.msra.mxu0 %v700
  %1044 = vmatprep.subr.bf16.mxu0 %v695
  %1045 = vmatpush2.bf16.msra.mxu0 %v694
  %1046 = vmatprep.mubr.bf16.mxu0 %v207
  %1047 = vmatmul.mubr.bf16.gmra.mxu0 %v206
  %v1048 = vpop.f32.mrf.mxu0
  %v1049 = vadd.f32 %v182, %v1048
  %v1050 = vpop.f32.mrf.mxu0
  %v1051 = vadd.f32 %v186, %v1050
  %v1052 = vpop.f32.mrf.mxu0
  %v1053 = vpop.f32.mrf.mxu0
  %1054 = vdwg.mxu0
  %1055 = vmatprep.subr.bf16.mxu0 %v785
  %1056 = vmatpush1.bf16.msra.mxu0 %v784
  %1057 = vmatprep.subr.bf16.mxu0 %v779
  %1058 = vmatpush1.bf16.msra.mxu0 %v778
  %1059 = vmatprep.subr.bf16.mxu0 %v773
  %1060 = vmatpush1.bf16.msra.mxu0 %v772
  %1061 = vmatprep.subr.bf16.mxu0 %v767
  %1062 = vmatpush1.bf16.msra.mxu0 %v766
  %1063 = vmatprep.subr.bf16.mxu0 %v761
  %1064 = vmatpush1.bf16.msra.mxu0 %v760
  %1065 = vmatprep.subr.bf16.mxu0 %v755
  %1066 = vmatpush1.bf16.msra.mxu0 %v754
  %1067 = vmatprep.subr.bf16.mxu0 %v749
  %1068 = vmatpush1.bf16.msra.mxu0 %v748
  %1069 = vmatprep.subr.bf16.mxu0 %v743
  %1070 = vmatpush1.bf16.msra.mxu0 %v742
  %1071 = vmatprep.subr.bf16.mxu0 0
  %1072 = vmatpush2.bf16.msra.mxu0 0
  %1073 = vmatprep.subr.bf16.mxu0 0
  %1074 = vmatpush2.bf16.msra.mxu0 0
  %1075 = vmatprep.subr.bf16.mxu0 0
  %1076 = vmatpush2.bf16.msra.mxu0 0
  %1077 = vmatprep.subr.bf16.mxu0 0
  %1078 = vmatpush2.bf16.msra.mxu0 0
  %1079 = vmatprep.subr.bf16.mxu0 0
  %1080 = vmatpush2.bf16.msra.mxu0 0
  %1081 = vmatprep.subr.bf16.mxu0 0
  %1082 = vmatpush2.bf16.msra.mxu0 0
  %1083 = vmatprep.subr.bf16.mxu0 0
  %1084 = vmatpush2.bf16.msra.mxu0 0
  %1085 = vmatprep.subr.bf16.mxu0 0
  %1086 = vmatpush2.bf16.msra.mxu0 0
  %1087 = vmatprep.mubr.bf16.mxu0 0
  %1088 = vmatmul.mubr.bf16.gmra.mxu0 %v208
  %v1089 = vpop.f32.mrf.mxu0
  %v1090 = vadd.f32 %v1049, %v1089
  %v1091 = vpop.f32.mrf.mxu0
  %v1092 = vadd.f32 %v1051, %v1091
  %v1093 = vpop.f32.mrf.mxu0
  %v1094 = vpop.f32.mrf.mxu0
  %1095 = vdwg.mxu0
  %1096 = vmatprep.subr.bf16.mxu0 %v691
  %1097 = vmatpush1.bf16.msra.mxu0 %v690
  %1098 = vmatprep.subr.bf16.mxu0 %v685
  %1099 = vmatpush1.bf16.msra.mxu0 %v684
  %1100 = vmatprep.subr.bf16.mxu0 %v679
  %1101 = vmatpush1.bf16.msra.mxu0 %v678
  %1102 = vmatprep.subr.bf16.mxu0 %v673
  %1103 = vmatpush1.bf16.msra.mxu0 %v672
  %1104 = vmatprep.subr.bf16.mxu0 %v667
  %1105 = vmatpush1.bf16.msra.mxu0 %v666
  %1106 = vmatprep.subr.bf16.mxu0 %v661
  %1107 = vmatpush1.bf16.msra.mxu0 %v660
  %1108 = vmatprep.subr.bf16.mxu0 %v655
  %1109 = vmatpush1.bf16.msra.mxu0 %v654
  %1110 = vmatprep.subr.bf16.mxu0 %v649
  %1111 = vmatpush1.bf16.msra.mxu0 %v648
  %1112 = vmatprep.subr.bf16.mxu0 %v739
  %1113 = vmatpush2.bf16.msra.mxu0 %v738
  %1114 = vmatprep.subr.bf16.mxu0 %v733
  %1115 = vmatpush2.bf16.msra.mxu0 %v732
  %1116 = vmatprep.subr.bf16.mxu0 %v727
  %1117 = vmatpush2.bf16.msra.mxu0 %v726
  %1118 = vmatprep.subr.bf16.mxu0 %v721
  %1119 = vmatpush2.bf16.msra.mxu0 %v720
  %1120 = vmatprep.subr.bf16.mxu0 %v715
  %1121 = vmatpush2.bf16.msra.mxu0 %v714
  %1122 = vmatprep.subr.bf16.mxu0 %v709
  %1123 = vmatpush2.bf16.msra.mxu0 %v708
  %1124 = vmatprep.subr.bf16.mxu0 %v703
  %1125 = vmatpush2.bf16.msra.mxu0 %v702
  %1126 = vmatprep.subr.bf16.mxu0 %v697
  %1127 = vmatpush2.bf16.msra.mxu0 %v696
  %1128 = vmatprep.mubr.bf16.mxu0 %v207
  %1129 = vmatmul.mubr.bf16.gmra.mxu0 %v206
  %v1130 = vpop.f32.mrf.mxu0
  %v1131 = vadd.f32 %v190, %v1130
  %v1132 = vpop.f32.mrf.mxu0
  %v1133 = vadd.f32 %v194, %v1132
  %v1134 = vpop.f32.mrf.mxu0
  %v1135 = vpop.f32.mrf.mxu0
  %1136 = vdwg.mxu0
  %1137 = vmatprep.subr.bf16.mxu0 %v787
  %1138 = vmatpush1.bf16.msra.mxu0 %v786
  %1139 = vmatprep.subr.bf16.mxu0 %v781
  %1140 = vmatpush1.bf16.msra.mxu0 %v780
  %1141 = vmatprep.subr.bf16.mxu0 %v775
  %1142 = vmatpush1.bf16.msra.mxu0 %v774
  %1143 = vmatprep.subr.bf16.mxu0 %v769
  %1144 = vmatpush1.bf16.msra.mxu0 %v768
  %1145 = vmatprep.subr.bf16.mxu0 %v763
  %1146 = vmatpush1.bf16.msra.mxu0 %v762
  %1147 = vmatprep.subr.bf16.mxu0 %v757
  %1148 = vmatpush1.bf16.msra.mxu0 %v756
  %1149 = vmatprep.subr.bf16.mxu0 %v751
  %1150 = vmatpush1.bf16.msra.mxu0 %v750
  %1151 = vmatprep.subr.bf16.mxu0 %v745
  %1152 = vmatpush1.bf16.msra.mxu0 %v744
  %1153 = vmatprep.subr.bf16.mxu0 0
  %1154 = vmatpush2.bf16.msra.mxu0 0
  %1155 = vmatprep.subr.bf16.mxu0 0
  %1156 = vmatpush2.bf16.msra.mxu0 0
  %1157 = vmatprep.subr.bf16.mxu0 0
  %1158 = vmatpush2.bf16.msra.mxu0 0
  %1159 = vmatprep.subr.bf16.mxu0 0
  %1160 = vmatpush2.bf16.msra.mxu0 0
  %1161 = vmatprep.subr.bf16.mxu0 0
  %1162 = vmatpush2.bf16.msra.mxu0 0
  %1163 = vmatprep.subr.bf16.mxu0 0
  %1164 = vmatpush2.bf16.msra.mxu0 0
  %1165 = vmatprep.subr.bf16.mxu0 0
  %1166 = vmatpush2.bf16.msra.mxu0 0
  %1167 = vmatprep.subr.bf16.mxu0 0
  %1168 = vmatpush2.bf16.msra.mxu0 0
  %1169 = vmatprep.mubr.bf16.mxu0 0
  %1170 = vmatmul.mubr.bf16.gmra.mxu0 %v208
  %v1171 = vpop.f32.mrf.mxu0
  %v1172 = vadd.f32 %v1131, %v1171
  %v1173 = vpop.f32.mrf.mxu0
  %v1174 = vadd.f32 %v1133, %v1173
  %v1175 = vpop.f32.mrf.mxu0
  %v1176 = vpop.f32.mrf.mxu0
  %1177 = vdwg.mxu0
  %v1178 = vmax.f32 %v1008, 0.0
  %v1179 = vmax.f32 %v1010, 0.0
  %v1180 = vmax.f32 %v1090, 0.0
  %v1181 = vmax.f32 %v1092, 0.0
  %v1182 = vmax.f32 %v1172, 0.0
  %v1183 = vmax.f32 %v1174, 0.0
  %v1184 = vpack.c.bf16 %v1178, %v1178
  %v1185 = vpack.c.bf16 %v1179, %v1179
  %v1186 = vpack.c.bf16 %v1180, %v1180
  %v1187 = vpack.c.bf16 %v1181, %v1181
  %v1188 = vpack.c.bf16 %v1182, %v1182
  %v1189 = vpack.c.bf16 %v1183, %v1183
  %v1190 = vld [vmem:[%s3] sm:$0xf]
  %v1191 = vld [vmem:[%s3 + $0x4] sm:$0xf]
  %v1192 = vld [vmem:[%s3 + $0x8] sm:$0xf]
  %v1193 = vld [vmem:[%s3 + $0xc] sm:$0xf]
  %v1194 = vld [vmem:[%s3 + $0x10] sm:$0xf]
  %v1195 = vld [vmem:[%s3 + $0x14] sm:$0xf]
  %v1196 = vld [vmem:[%s3 + $0x18] sm:$0xf]
  %v1197 = vld [vmem:[%s3 + $0x1c] sm:$0xf]
  %v1198 = vld [vmem:[%s3 + $0x20] sm:$0xf]
  %v1199 = vld [vmem:[%s3 + $0x24] sm:$0xf]
  %v1200 = vld [vmem:[%s3 + $0x28] sm:$0xf]
  %v1201 = vld [vmem:[%s3 + $0x2c] sm:$0xf]
  %v1202 = vld [vmem:[%s3 + $0x30] sm:$0xf]
  %v1203 = vld [vmem:[%s3 + $0x34] sm:$0xf]
  %v1204 = vld [vmem:[%s3 + $0x38] sm:$0xf]
  %v1205 = vld [vmem:[%s3 + $0x3c] sm:$0xf]
  %v1206 = vld [vmem:[%s3 + $0x40] sm:$0xf]
  %v1207 = vld [vmem:[%s3 + $0x44] sm:$0xf]
  %v1208 = vld [vmem:[%s3 + $0x48] sm:$0xf]
  %v1209 = vld [vmem:[%s3 + $0x4c] sm:$0xf]
  %v1210 = vld [vmem:[%s3 + $0x50] sm:$0xf]
  %v1211 = vld [vmem:[%s3 + $0x54] sm:$0xf]
  %v1212 = vld [vmem:[%s3 + $0x58] sm:$0xf]
  %v1213 = vld [vmem:[%s3 + $0x5c] sm:$0xf]
  %v1214 = vld [vmem:[%s3 + $0x60] sm:$0xf]
  %v1215 = vld [vmem:[%s3 + $0x64] sm:$0xf]
  %v1216 = vld [vmem:[%s3 + $0x68] sm:$0xf]
  %v1217 = vld [vmem:[%s3 + $0x6c] sm:$0xf]
  %v1218 = vld [vmem:[%s3 + $0x70] sm:$0xf]
  %v1219 = vld [vmem:[%s3 + $0x74] sm:$0xf]
  %v1220 = vld [vmem:[%s3 + $0x78] sm:$0xf]
  %v1221 = vld [vmem:[%s3 + $0x7c] sm:$0xf]
  %v1222 = vld [vmem:[%s3 + $0x80] sm:$0xf]
  %v1223 = vld [vmem:[%s3 + $0x84] sm:$0xf]
  %v1224 = vld [vmem:[%s3 + $0x88] sm:$0xf]
  %v1225 = vld [vmem:[%s3 + $0x8c] sm:$0xf]
  %v1226 = vld [vmem:[%s3 + $0x90] sm:$0xf]
  %v1227 = vld [vmem:[%s3 + $0x94] sm:$0xf]
  %v1228 = vld [vmem:[%s3 + $0x98] sm:$0xf]
  %v1229 = vld [vmem:[%s3 + $0x9c] sm:$0xf]
  %v1230 = vld [vmem:[%s3 + $0xa0] sm:$0xf]
  %v1231 = vld [vmem:[%s3 + $0xa4] sm:$0xf]
  %v1232 = vld [vmem:[%s3 + $0xa8] sm:$0xf]
  %v1233 = vld [vmem:[%s3 + $0xac] sm:$0xf]
  %v1234 = vld [vmem:[%s3 + $0xb0] sm:$0xf]
  %v1235 = vld [vmem:[%s3 + $0xb4] sm:$0xf]
  %v1236 = vld [vmem:[%s3 + $0xb8] sm:$0xf]
  %v1237 = vld [vmem:[%s3 + $0xbc] sm:$0xf]
  %v1238 = vld [vmem:[%s3 + $0xc0] sm:$0xf]
  %v1239 = vld [vmem:[%s3 + $0xc4] sm:$0xf]
  %v1240 = vld [vmem:[%s3 + $0xc8] sm:$0xf]
  %v1241 = vld [vmem:[%s3 + $0xcc] sm:$0xf]
  %v1242 = vld [vmem:[%s3 + $0xd0] sm:$0xf]
  %v1243 = vld [vmem:[%s3 + $0xd4] sm:$0xf]
  %v1244 = vld [vmem:[%s3 + $0xd8] sm:$0xf]
  %v1245 = vld [vmem:[%s3 + $0xdc] sm:$0xf]
  %v1246 = vld [vmem:[%s3 + $0xe0] sm:$0xf]
  %v1247 = vld [vmem:[%s3 + $0xe4] sm:$0xf]
  %v1248 = vld [vmem:[%s3 + $0xe8] sm:$0xf]
  %v1249 = vld [vmem:[%s3 + $0xec] sm:$0xf]
  %v1250 = vld [vmem:[%s3 + $0xf0] sm:$0xf]
  %v1251 = vld [vmem:[%s3 + $0xf4] sm:$0xf]
  %v1252 = vld [vmem:[%s3 + $0xf8] sm:$0xf]
  %v1253 = vld [vmem:[%s3 + $0xfc] sm:$0xf]
  %v1254 = vld [vmem:[%s3 + $0x100] sm:$0xf]
  %v1255 = vld [vmem:[%s3 + $0x104] sm:$0xf]
  %v1256 = vld [vmem:[%s3 + $0x108] sm:$0xf]
  %v1257 = vld [vmem:[%s3 + $0x10c] sm:$0xf]
  %v1258 = vld [vmem:[%s3 + $0x110] sm:$0xf]
  %v1259 = vld [vmem:[%s3 + $0x114] sm:$0xf]
  %v1260 = vld [vmem:[%s3 + $0x118] sm:$0xf]
  %v1261 = vld [vmem:[%s3 + $0x11c] sm:$0xf]
  %v1262 = vld [vmem:[%s3 + $0x120] sm:$0xf]
  %v1263 = vld [vmem:[%s3 + $0x124] sm:$0xf]
  %v1264 = vld [vmem:[%s3 + $0x128] sm:$0xf]
  %v1265 = vld [vmem:[%s3 + $0x12c] sm:$0xf]
  %v1266 = vld [vmem:[%s3 + $0x130] sm:$0xf]
  %v1267 = vld [vmem:[%s3 + $0x134] sm:$0xf]
  %v1268 = vld [vmem:[%s3 + $0x138] sm:$0xf]
  %v1269 = vld [vmem:[%s3 + $0x13c] sm:$0xf]
  %v1270 = vld [vmem:[%s3 + $0x140] sm:$0xf]
  %v1271 = vld [vmem:[%s3 + $0x144] sm:$0xf]
  %v1272 = vld [vmem:[%s3 + $0x148] sm:$0xf]
  %v1273 = vld [vmem:[%s3 + $0x14c] sm:$0xf]
  %v1274 = vld [vmem:[%s3 + $0x150] sm:$0xf]
  %v1275 = vld [vmem:[%s3 + $0x154] sm:$0xf]
  %v1276 = vld [vmem:[%s3 + $0x158] sm:$0xf]
  %v1277 = vld [vmem:[%s3 + $0x15c] sm:$0x3]
  %v1278 = vld [vmem:[#allocation2] sm:$0x1]
  %v1280 = vlaneseq
  %v1281 = vshrl.u32 %v1280, 7
  %v1282 = vsub.s32 0, %v1281
  %v1283 = vrot.slane %v1278, %v1282
  %v1373 = vunpack.c.l.b16 %v1190
  %v1374 = vunpack.c.l.b16 %v1191
  %v1375 = vunpack.c.l.b16 %v1192
  %v1376 = vunpack.c.l.b16 %v1193
  %v1377 = vunpack.c.l.b16 %v1194
  %v1378 = vunpack.c.l.b16 %v1195
  %v1379 = vunpack.c.l.b16 %v1196
  %v1380 = vunpack.c.l.b16 %v1197
  %v1381 = vunpack.c.l.b16 %v1198
  %v1382 = vunpack.c.l.b16 %v1199
  %v1383 = vunpack.c.l.b16 %v1200
  %v1384 = vunpack.c.l.b16 %v1201
  %v1385 = vunpack.c.l.b16 %v1202
  %v1386 = vunpack.c.l.b16 %v1203
  %v1387 = vunpack.c.l.b16 %v1204
  %v1388 = vunpack.c.l.b16 %v1205
  %v1389 = vunpack.c.l.b16 %v1206
  %v1390 = vunpack.c.l.b16 %v1207
  %v1391 = vunpack.c.l.b16 %v1208
  %v1392 = vunpack.c.l.b16 %v1209
  %v1393 = vunpack.c.l.b16 %v1210
  %v1394 = vunpack.c.l.b16 %v1211
  %v1395 = vunpack.c.l.b16 %v1212
  %v1396 = vunpack.c.l.b16 %v1213
  %v1397 = vunpack.c.l.b16 %v1214
  %v1398 = vunpack.c.l.b16 %v1215
  %v1399 = vunpack.c.l.b16 %v1216
  %v1400 = vunpack.c.l.b16 %v1217
  %v1401 = vunpack.c.l.b16 %v1218
  %v1402 = vunpack.c.l.b16 %v1219
  %v1403 = vunpack.c.l.b16 %v1220
  %v1404 = vunpack.c.l.b16 %v1221
  %v1405 = vunpack.c.l.b16 %v1222
  %v1406 = vunpack.c.l.b16 %v1223
  %v1407 = vunpack.c.l.b16 %v1224
  %v1408 = vunpack.c.l.b16 %v1225
  %v1409 = vunpack.c.l.b16 %v1226
  %v1410 = vunpack.c.l.b16 %v1227
  %v1411 = vunpack.c.l.b16 %v1228
  %v1412 = vunpack.c.l.b16 %v1229
  %v1413 = vunpack.c.l.b16 %v1230
  %v1414 = vunpack.c.l.b16 %v1231
  %v1415 = vunpack.c.l.b16 %v1232
  %v1416 = vunpack.c.l.b16 %v1233
  %v1417 = vunpack.c.l.b16 %v1234
  %v1418 = vunpack.c.l.b16 %v1235
  %v1419 = vunpack.c.l.b16 %v1236
  %v1420 = vunpack.c.l.b16 %v1237
  %v1421 = vunpack.c.l.b16 %v1238
  %v1422 = vunpack.c.l.b16 %v1239
  %v1423 = vunpack.c.l.b16 %v1240
  %v1424 = vunpack.c.l.b16 %v1241
  %v1425 = vunpack.c.l.b16 %v1242
  %v1426 = vunpack.c.l.b16 %v1243
  %v1427 = vunpack.c.l.b16 %v1244
  %v1428 = vunpack.c.l.b16 %v1245
  %v1429 = vunpack.c.l.b16 %v1246
  %v1430 = vunpack.c.l.b16 %v1247
  %v1431 = vunpack.c.l.b16 %v1248
  %v1432 = vunpack.c.l.b16 %v1249
  %v1433 = vunpack.c.l.b16 %v1250
  %v1434 = vunpack.c.l.b16 %v1251
  %v1435 = vunpack.c.l.b16 %v1252
  %v1436 = vunpack.c.l.b16 %v1253
  %v1437 = vunpack.c.l.b16 %v1254
  %v1438 = vunpack.c.l.b16 %v1255
  %v1439 = vunpack.c.l.b16 %v1256
  %v1440 = vunpack.c.l.b16 %v1257
  %v1441 = vunpack.c.l.b16 %v1258
  %v1442 = vunpack.c.l.b16 %v1259
  %v1443 = vunpack.c.l.b16 %v1260
  %v1444 = vunpack.c.l.b16 %v1261
  %v1445 = vunpack.c.l.b16 %v1262
  %v1446 = vunpack.c.l.b16 %v1263
  %v1447 = vunpack.c.l.b16 %v1264
  %v1448 = vunpack.c.l.b16 %v1265
  %v1449 = vunpack.c.l.b16 %v1266
  %v1450 = vunpack.c.l.b16 %v1267
  %v1451 = vunpack.c.l.b16 %v1268
  %v1452 = vunpack.c.l.b16 %v1269
  %v1453 = vunpack.c.l.b16 %v1270
  %v1454 = vunpack.c.l.b16 %v1271
  %v1455 = vunpack.c.l.b16 %v1272
  %v1456 = vunpack.c.l.b16 %v1273
  %v1457 = vunpack.c.l.b16 %v1274
  %v1458 = vunpack.c.l.b16 %v1275
  %v1459 = vunpack.c.l.b16 %v1276
  %v1460 = vunpack.c.l.b16 %v1277
  %v1461 = vpack.c.b16 %v1374, %v1373
  %v1462 = vpack.c.b16 %v1376, %v1375
  %v1463 = vpack.c.b16 %v1378, %v1377
  %v1464 = vpack.c.b16 %v1380, %v1379
  %v1465 = vpack.c.b16 %v1382, %v1381
  %v1466 = vpack.c.b16 %v1384, %v1383
  %v1467 = vpack.c.b16 %v1386, %v1385
  %v1468 = vpack.c.b16 %v1388, %v1387
  %v1469 = vpack.c.b16 %v1390, %v1389
  %v1470 = vpack.c.b16 %v1392, %v1391
  %v1471 = vpack.c.b16 %v1394, %v1393
  %v1472 = vpack.c.b16 %v1396, %v1395
  %v1473 = vpack.c.b16 %v1398, %v1397
  %v1474 = vpack.c.b16 %v1400, %v1399
  %v1475 = vpack.c.b16 %v1402, %v1401
  %v1476 = vpack.c.b16 %v1404, %v1403
  %v1477 = vpack.c.b16 %v1406, %v1405
  %v1478 = vpack.c.b16 %v1408, %v1407
  %v1479 = vpack.c.b16 %v1410, %v1409
  %v1480 = vpack.c.b16 %v1412, %v1411
  %v1481 = vpack.c.b16 %v1414, %v1413
  %v1482 = vpack.c.b16 %v1416, %v1415
  %v1483 = vpack.c.b16 %v1418, %v1417
  %v1484 = vpack.c.b16 %v1420, %v1419
  %v1485 = vpack.c.b16 %v1422, %v1421
  %v1486 = vpack.c.b16 %v1424, %v1423
  %v1487 = vpack.c.b16 %v1426, %v1425
  %v1488 = vpack.c.b16 %v1428, %v1427
  %v1489 = vpack.c.b16 %v1430, %v1429
  %v1490 = vpack.c.b16 %v1432, %v1431
  %v1491 = vpack.c.b16 %v1434, %v1433
  %v1492 = vpack.c.b16 %v1436, %v1435
  %v1493 = vpack.c.b16 %v1438, %v1437
  %v1494 = vpack.c.b16 %v1440, %v1439
  %v1495 = vpack.c.b16 %v1442, %v1441
  %v1496 = vpack.c.b16 %v1444, %v1443
  %v1497 = vpack.c.b16 %v1446, %v1445
  %v1498 = vpack.c.b16 %v1448, %v1447
  %v1499 = vpack.c.b16 %v1450, %v1449
  %v1500 = vpack.c.b16 %v1452, %v1451
  %v1501 = vpack.c.b16 %v1454, %v1453
  %v1502 = vpack.c.b16 %v1456, %v1455
  %v1503 = vpack.c.b16 %v1458, %v1457
  %v1504 = vpack.c.b16 %v1460, %v1459
  %vm1548 = vcmask 490496
  %v1550 = vsel %vm1548, %v1189, 0
  %vm1552 = vcmask 1045504
  %v1554 = vsel %vm1552, %v1504, 0
  %1556 = vmatprep.subr.bf16.mxu0 0
  %1557 = vmatpush1.bf16.msra.mxu0 %v1468
  %1558 = vmatprep.subr.bf16.mxu0 0
  %1559 = vmatpush1.bf16.msra.mxu0 %v1467
  %1560 = vmatprep.subr.bf16.mxu0 0
  %1561 = vmatpush1.bf16.msra.mxu0 %v1466
  %1562 = vmatprep.subr.bf16.mxu0 0
  %1563 = vmatpush1.bf16.msra.mxu0 %v1465
  %1564 = vmatprep.subr.bf16.mxu0 0
  %1565 = vmatpush1.bf16.msra.mxu0 %v1464
  %1566 = vmatprep.subr.bf16.mxu0 0
  %1567 = vmatpush1.bf16.msra.mxu0 %v1463
  %1568 = vmatprep.subr.bf16.mxu0 0
  %1569 = vmatpush1.bf16.msra.mxu0 %v1462
  %1570 = vmatprep.subr.bf16.mxu0 0
  %1571 = vmatpush1.bf16.msra.mxu0 %v1461
  %1572 = vmatprep.subr.bf16.mxu0 0
  %1573 = vmatpush2.bf16.msra.mxu0 %v1476
  %1574 = vmatprep.subr.bf16.mxu0 0
  %1575 = vmatpush2.bf16.msra.mxu0 %v1475
  %1576 = vmatprep.subr.bf16.mxu0 0
  %1577 = vmatpush2.bf16.msra.mxu0 %v1474
  %1578 = vmatprep.subr.bf16.mxu0 0
  %1579 = vmatpush2.bf16.msra.mxu0 %v1473
  %1580 = vmatprep.subr.bf16.mxu0 0
  %1581 = vmatpush2.bf16.msra.mxu0 %v1472
  %1582 = vmatprep.subr.bf16.mxu0 0
  %1583 = vmatpush2.bf16.msra.mxu0 %v1471
  %1584 = vmatprep.subr.bf16.mxu0 0
  %1585 = vmatpush2.bf16.msra.mxu0 %v1470
  %1586 = vmatprep.subr.bf16.mxu0 0
  %1587 = vmatpush2.bf16.msra.mxu0 %v1469
  %1588 = vmatprep.mubr.bf16.mxu0 %v1185
  %1589 = vmatmul.mubr.bf16.gmra.mxu0 %v1184
  %v1590 = vpop.f32.mrf.mxu0
  %v1591 = vadd.f32 %v1283, %v1590
  %v1592 = vpop.f32.mrf.mxu0
  %v1593 = vpop.f32.mrf.mxu0
  %v1594 = vpop.f32.mrf.mxu0
  %1595 = vdwg.mxu0
  %1596 = vmatprep.subr.bf16.mxu0 0
  %1597 = vmatpush1.bf16.msra.mxu0 %v1484
  %1598 = vmatprep.subr.bf16.mxu0 0
  %1599 = vmatpush1.bf16.msra.mxu0 %v1483
  %1600 = vmatprep.subr.bf16.mxu0 0
  %1601 = vmatpush1.bf16.msra.mxu0 %v1482
  %1602 = vmatprep.subr.bf16.mxu0 0
  %1603 = vmatpush1.bf16.msra.mxu0 %v1481
  %1604 = vmatprep.subr.bf16.mxu0 0
  %1605 = vmatpush1.bf16.msra.mxu0 %v1480
  %1606 = vmatprep.subr.bf16.mxu0 0
  %1607 = vmatpush1.bf16.msra.mxu0 %v1479
  %1608 = vmatprep.subr.bf16.mxu0 0
  %1609 = vmatpush1.bf16.msra.mxu0 %v1478
  %1610 = vmatprep.subr.bf16.mxu0 0
  %1611 = vmatpush1.bf16.msra.mxu0 %v1477
  %1612 = vmatprep.subr.bf16.mxu0 0
  %1613 = vmatpush2.bf16.msra.mxu0 %v1492
  %1614 = vmatprep.subr.bf16.mxu0 0
  %1615 = vmatpush2.bf16.msra.mxu0 %v1491
  %1616 = vmatprep.subr.bf16.mxu0 0
  %1617 = vmatpush2.bf16.msra.mxu0 %v1490
  %1618 = vmatprep.subr.bf16.mxu0 0
  %1619 = vmatpush2.bf16.msra.mxu0 %v1489
  %1620 = vmatprep.subr.bf16.mxu0 0
  %1621 = vmatpush2.bf16.msra.mxu0 %v1488
  %1622 = vmatprep.subr.bf16.mxu0 0
  %1623 = vmatpush2.bf16.msra.mxu0 %v1487
  %1624 = vmatprep.subr.bf16.mxu0 0
  %1625 = vmatpush2.bf16.msra.mxu0 %v1486
  %1626 = vmatprep.subr.bf16.mxu0 0
  %1627 = vmatpush2.bf16.msra.mxu0 %v1485
  %1628 = vmatprep.mubr.bf16.mxu0 %v1187
  %1629 = vmatmul.mubr.bf16.gmra.mxu0 %v1186
  %v1630 = vpop.f32.mrf.mxu0
  %v1631 = vadd.f32 %v1591, %v1630
  %v1632 = vpop.f32.mrf.mxu0
  %v1633 = vpop.f32.mrf.mxu0
  %v1634 = vpop.f32.mrf.mxu0
  %1635 = vdwg.mxu0
  %1636 = vmatprep.subr.bf16.mxu0 0
  %1637 = vmatpush1.bf16.msra.mxu0 %v1500
  %1638 = vmatprep.subr.bf16.mxu0 0
  %1639 = vmatpush1.bf16.msra.mxu0 %v1499
  %1640 = vmatprep.subr.bf16.mxu0 0
  %1641 = vmatpush1.bf16.msra.mxu0 %v1498
  %1642 = vmatprep.subr.bf16.mxu0 0
  %1643 = vmatpush1.bf16.msra.mxu0 %v1497
  %1644 = vmatprep.subr.bf16.mxu0 0
  %1645 = vmatpush1.bf16.msra.mxu0 %v1496
  %1646 = vmatprep.subr.bf16.mxu0 0
  %1647 = vmatpush1.bf16.msra.mxu0 %v1495
  %1648 = vmatprep.subr.bf16.mxu0 0
  %1649 = vmatpush1.bf16.msra.mxu0 %v1494
  %1650 = vmatprep.subr.bf16.mxu0 0
  %1651 = vmatpush1.bf16.msra.mxu0 %v1493
  %1652 = vmatprep.subr.bf16.mxu0 0
  %1653 = vmatpush2.bf16.msra.mxu0 0
  %1654 = vmatprep.subr.bf16.mxu0 0
  %1655 = vmatpush2.bf16.msra.mxu0 0
  %1656 = vmatprep.subr.bf16.mxu0 0
  %1657 = vmatpush2.bf16.msra.mxu0 0
  %1658 = vmatprep.subr.bf16.mxu0 0
  %1659 = vmatpush2.bf16.msra.mxu0 0
  %1660 = vmatprep.subr.bf16.mxu0 0
  %1661 = vmatpush2.bf16.msra.mxu0 %v1554
  %1662 = vmatprep.subr.bf16.mxu0 0
  %1663 = vmatpush2.bf16.msra.mxu0 %v1503
  %1664 = vmatprep.subr.bf16.mxu0 0
  %1665 = vmatpush2.bf16.msra.mxu0 %v1502
  %1666 = vmatprep.subr.bf16.mxu0 0
  %1667 = vmatpush2.bf16.msra.mxu0 %v1501
  %1668 = vmatprep.mubr.bf16.mxu0 %v1550
  %1669 = vmatmul.mubr.bf16.gmra.mxu0 %v1188
  %v1670 = vpop.f32.mrf.mxu0
  %v1671 = vadd.f32 %v1631, %v1670
  %v1672 = vpop.f32.mrf.mxu0
  %v1673 = vpop.f32.mrf.mxu0
  %v1674 = vpop.f32.mrf.mxu0
  %1675 = vdwg.mxu0
  %vm1676 = vcmask 7168
  %1677 = vst.msk [vmem:[%s5] sm:$0xff] %vm1676, %v1671
  // Predicated region
  $region22: #{critic_forward.1} parent=0 // pred_check
    _
  $region23: #{critic_forward.1} parent=0 // pred_check_branch
    %1679 = sbr.rel (0) target = $region25
  $region24: #{critic_forward.1} parent=0 // pred_region
    _
  $region25: #{critic_forward.1} parent=0 // pred_fallthru
    _
  // Predicated region
  $region26: #{critic_forward.1} parent=0 // pred_check
    _
  $region27: #{critic_forward.1} parent=0 // pred_check_branch
    %1681 = sbr.rel (0) target = $region29
  $region28: #{critic_forward.1} parent=0 // pred_region
    _
  $region29: #{critic_forward.1} parent=0 // pred_fallthru
    _

</llo_original>
